<compile_context>
chip_gen: v5e
topology: v5e:2x2
jax: 0.10.0
libtpu: 0.0.40
codegen_flags: <defaults>
</compile_context>

<pallas_src>
import functools

import jax
import jax.numpy as jnp
from jax.experimental import pallas as pl
from jax.experimental.pallas import tpu as pltpu

_LANE = 128
_BF16_SUBLANE = 16  # bf16 packs 16 rows per vreg tile; keep slab blocks 16-row aligned


def _round_up(n, m):
    return ((n + m - 1) // m) * m


def _mlp_kernel(x_ref, p_ref, o_ref, *, layer_meta):
    """Fused MLP forward for one batch tile.

    x_ref : (TILE_B, in_pad0)       bf16 input tile (features zero-padded to in_pad0)
    p_ref : (slab_rows, slab_width) bf16 packed params; blocks start at 16-row boundaries
    o_ref : (TILE_B, out_pad_last)  x.dtype, lane-dense logits (padded lanes are exact zeros)
    layer_meta : static tuple of (w_row_off, in_pad, out_pad, b_row_off) per layer.
    """
    num_layers = len(layer_meta)
    h = x_ref[...]                                        # bf16 operand for the first matmul
    for i, (w_off, in_pad, out_pad, b_off) in enumerate(layer_meta):
        w = p_ref[w_off:w_off + in_pad, 0:out_pad]        # static, tile-aligned view (bf16)
        b = p_ref[b_off:b_off + 1, 0:out_pad]             # (1, out_pad) bias row, broadcasts over batch
        acc = jnp.dot(h, w, preferred_element_type=jnp.float32) + b   # single-pass MXU, f32 acc
        if i < num_layers - 1:
            acc = jnp.maximum(acc, 0.0)                   # ReLU in f32 (v5e VPU has no bf16 math)
            h = acc.astype(jnp.bfloat16)                  # bf16 operand for the next MXU pass
        else:
            o_ref[...] = acc.astype(o_ref.dtype)          # lane-dense 128-wide store


def pack_policy_params(params):
    """Pack per-layer (W:(in,out), b:(1,out)) into one zero-padded, tile-aligned bf16 slab.

    Row layout: [W0 (in_pad0 x SW)] [b0 (16 x SW)] [W1 (out_pad0 x SW)] [b1 (16 x SW)] ...
    Hidden/output feature dims are padded to multiples of 128 lanes; only W0's row count follows
    the (unpadded-to-128) input feature dim. All padded entries are exact zeros, so padded lanes
    stay zero through matmul + bias + ReLU.
    """
    state_size = params[0][0].shape[0]
    out_pads = [_round_up(w.shape[1], _LANE) for w, _ in params]
    in_pads = [_round_up(state_size, _BF16_SUBLANE)] + out_pads[:-1]
    slab_w = max(out_pads)

    blocks, meta, row = [], [], 0
    for (w, b), ip, op in zip(params, in_pads, out_pads):
        fi, fo = w.shape
        w_blk = jnp.zeros((ip, slab_w), jnp.float32).at[:fi, :fo].set(w.astype(jnp.float32))
        b_blk = jnp.zeros((_BF16_SUBLANE, slab_w), jnp.float32).at[0, :fo].set(
            jnp.reshape(b, (-1,)).astype(jnp.float32))
        meta.append((row, ip, op, row + ip))
        blocks.append(w_blk)
        blocks.append(b_blk)
        row += ip + _BF16_SUBLANE
    slab = jnp.concatenate(blocks, axis=0).astype(jnp.bfloat16)
    return slab, tuple(meta)


def make_policy_forward(params, *, max_tile_b=512, core_parallel=False):
    """Pack params once and return a jitted forward: x (batch, state_size) -> (batch, action_size).

    Set core_parallel=True on v7x (with batch >= 2 * tile_b) to shard the batch grid axis across
    the 2 TensorCores; the default "parallel" is the safe choice on v5e/v6e.
    """
    slab, layer_meta = pack_policy_params(params)
    state_size = params[0][0].shape[0]
    action_size = params[-1][0].shape[1]
    in_pad0 = layer_meta[0][1]
    out_pad_last = layer_meta[-1][2]
    flops_per_row = 2 * sum(w.shape[0] * w.shape[1] for w, _ in params)

    kernel = functools.partial(_mlp_kernel, layer_meta=layer_meta)
    semantics = (pltpu.CORE_PARALLEL,) if core_parallel else ("parallel",)

    @jax.jit
    def forward(x):
        batch = x.shape[0]
        # Batch tiling: multiple of 8, capped at max_tile_b; grid of 1 for tiny batches.
        b_pad = _round_up(batch, 8)
        tile_b = min(b_pad, max_tile_b)
        b_pad = _round_up(b_pad, tile_b)
        grid = (b_pad // tile_b,)

        xb = x.astype(jnp.bfloat16)
        xb = jnp.pad(xb, ((0, b_pad - batch), (0, in_pad0 - state_size)))

        flops = flops_per_row * batch
        bytes_accessed = int(xb.size * 2 + slab.size * 2
                             + b_pad * out_pad_last * x.dtype.itemsize)

        out_padded = pl.pallas_call(
            kernel,
            out_shape=jax.ShapeDtypeStruct((b_pad, out_pad_last), x.dtype),
            grid=grid,
            in_specs=[
                pl.BlockSpec((tile_b, in_pad0), lambda i: (i, 0)),   # stream batch tiles
                pl.BlockSpec(slab.shape, lambda i: (0, 0)),          # params stay VMEM-resident
            ],
            out_specs=pl.BlockSpec((tile_b, out_pad_last), lambda i: (i, 0)),
            compiler_params=pltpu.CompilerParams(dimension_semantics=semantics),
            cost_estimate=pl.CostEstimate(flops=flops, transcendentals=0,
                                          bytes_accessed=bytes_accessed),
        )(xb, slab)

        # Kernel stores a lane-dense 128-wide slab; slice to logits here (fused under the jit).
        return out_padded[:batch, :action_size]

    return forward


def init_policy_params(key, state_size, action_size, hidden_layers_config):
    """Deterministic init mimicking PyTorch nn.Linear default (U[-1/sqrt(fan_in), 1/sqrt(fan_in)])."""
    sizes = [state_size] + list(hidden_layers_config) + [action_size]
    params = []
    for i in range(len(sizes) - 1):
        fan_in, fan_out = sizes[i], sizes[i + 1]
        key, kw, kb = jax.random.split(key, 3)
        bound = float(1.0 / (fan_in ** 0.5))
        w = jax.random.uniform(kw, (fan_in, fan_out), jnp.float32, -bound, bound)
        b = jax.random.uniform(kb, (1, fan_out), jnp.float32, -bound, bound)
        params.append((w, b))
    return params


def reference_forward_f32(x, params):
    """Pure-JAX f32 reference of PolicyNetwork.forward."""
    h = x
    for i, (w, b) in enumerate(params):
        h = h @ w + jnp.reshape(b, (1, -1))
        if i < len(params) - 1:
            h = jnp.maximum(h, 0.0)
    return h


def reference_forward_bf16(x, params):
    """Reference mimicking the kernel's numerics: bf16 operands, f32 MXU accumulation."""
    h = x.astype(jnp.bfloat16)
    out = None
    for i, (w, b) in enumerate(params):
        out = (jnp.dot(h, w.astype(jnp.bfloat16), preferred_element_type=jnp.float32)
               + jnp.reshape(b, (1, -1)).astype(jnp.bfloat16))
        if i < len(params) - 1:
            h = jnp.maximum(out, 0.0).astype(jnp.bfloat16)
    return out.astype(x.dtype)


if __name__ == "__main__":
    key = jax.random.PRNGKey(0)

    # Shapes consistent with the module: state_size=16, hidden=[32, 32], action_size=4.
    state_size = 16
    action_size = 4
    hidden_layers_config = [32, 32]

    params = init_policy_params(key, state_size, action_size, hidden_layers_config)

    # Pack params + jit the forward ONCE (the per-call path is a single fused dispatch).
    forward = make_policy_forward(params)

    # Primary check: tiny batch (single grid step).
    key, kx = jax.random.split(key)
    x = jax.random.normal(kx, (8, state_size), jnp.float32)
    out = jax.block_until_ready(forward(x))
    assert out.shape == (8, action_size)
    assert jnp.allclose(out, reference_forward_bf16(x, params), atol=1e-3, rtol=1e-3), \
        "mismatch vs bf16-numerics reference (batch=8)"
    assert jnp.allclose(out, reference_forward_f32(x, params), atol=2e-2, rtol=2e-2), \
        "mismatch vs f32 reference (batch=8)"

    # Secondary check: non-aligned larger batch exercising the parallel batch grid + padding.
    forward_small_tiles = make_policy_forward(params, max_tile_b=64)
    key, kx2 = jax.random.split(key)
    x2 = jax.random.normal(kx2, (200, state_size), jnp.float32)
    out2 = jax.block_until_ready(forward_small_tiles(x2))
    assert out2.shape == (200, action_size)
    assert jnp.allclose(out2, reference_forward_bf16(x2, params), atol=1e-3, rtol=1e-3), \
        "mismatch vs bf16-numerics reference (batch=200)"
    assert jnp.allclose(out2, reference_forward_f32(x2, params), atol=2e-2, rtol=2e-2), \
        "mismatch vs f32 reference (batch=200)"

    print("KERNEL_OK")
</pallas_src>

<mosaic_0001>
module attributes {stable_mosaic.version = 11 : i64} {
  func.func @_mlp_kernel(%arg0: i32, %arg1: memref<8x16xbf16, #tpu.memory_space<vmem>>, %arg2: memref<320x128xbf16, #tpu.memory_space<vmem>>, %arg3: memref<8x128xf32, #tpu.memory_space<vmem>>) attributes {dimension_semantics = [#tpu.dimension_semantics<parallel>], iteration_bounds = array<i64: 1>, scalar_prefetch = 0 : i64, scratch_operands = 0 : i64, tpu.core_type = #tpu.core_type<tc>, window_params = [{transform_indices = @transform_0, window_bounds = array<i64: 8, 16>}, {pipeline_mode = #tpu.pipeline_mode<synchronous>, transform_indices = @transform_1, window_bounds = array<i64: 320, 128>}, {transform_indices = @transform_2, window_bounds = array<i64: 8, 128>}]} {
    %c0 = arith.constant 0 : index
    %c0_0 = arith.constant 0 : index
    %0 = vector.load %arg1[%c0, %c0_0] : memref<8x16xbf16, #tpu.memory_space<vmem>>, vector<8x16xbf16>
    %c0_1 = arith.constant 0 : index
    %c0_2 = arith.constant 0 : index
    %1 = vector.load %arg2[%c0_1, %c0_2] : memref<320x128xbf16, #tpu.memory_space<vmem>>, vector<16x128xbf16>
    %c16 = arith.constant 16 : index
    %c0_3 = arith.constant 0 : index
    %2 = vector.load %arg2[%c16, %c0_3] : memref<320x128xbf16, #tpu.memory_space<vmem>>, vector<1x128xbf16>
    %cst = arith.constant dense<0.000000e+00> : vector<8x128xf32>
    %3 = tpu.matmul %0, %1, %cst {dimension_numbers = #tpu.dot_dimension_numbers<[1], [0], [0], [1], [0, 0, 1, 1], [], []>} : vector<8x16xbf16>, vector<16x128xbf16>, vector<8x128xf32> -> vector<8x128xf32>
    %4 = arith.extf %2 : vector<1x128xbf16> to vector<1x128xf32>
    %5 = vector.broadcast %4 : vector<1x128xf32> to vector<8x128xf32>
    %6 = arith.addf %3, %5 : vector<8x128xf32>
    %cst_4 = arith.constant 0.000000e+00 : f32
    %7 = vector.broadcast %cst_4 : f32 to vector<8x128xf32>
    %8 = arith.maximumf %6, %7 : vector<8x128xf32>
    %9 = arith.truncf %8 : vector<8x128xf32> to vector<8x128xbf16>
    %c32 = arith.constant 32 : index
    %c0_5 = arith.constant 0 : index
    %10 = vector.load %arg2[%c32, %c0_5] : memref<320x128xbf16, #tpu.memory_space<vmem>>, vector<128x128xbf16>
    %c160 = arith.constant 160 : index
    %c0_6 = arith.constant 0 : index
    %11 = vector.load %arg2[%c160, %c0_6] : memref<320x128xbf16, #tpu.memory_space<vmem>>, vector<1x128xbf16>
    %cst_7 = arith.constant dense<0.000000e+00> : vector<8x128xf32>
    %12 = tpu.matmul %9, %10, %cst_7 {dimension_numbers = #tpu.dot_dimension_numbers<[1], [0], [0], [1], [0, 0, 1, 1], [], []>} : vector<8x128xbf16>, vector<128x128xbf16>, vector<8x128xf32> -> vector<8x128xf32>
    %13 = arith.extf %11 : vector<1x128xbf16> to vector<1x128xf32>
    %14 = vector.broadcast %13 : vector<1x128xf32> to vector<8x128xf32>
    %15 = arith.addf %12, %14 : vector<8x128xf32>
    %cst_8 = arith.constant 0.000000e+00 : f32
    %16 = vector.broadcast %cst_8 : f32 to vector<8x128xf32>
    %17 = arith.maximumf %15, %16 : vector<8x128xf32>
    %18 = arith.truncf %17 : vector<8x128xf32> to vector<8x128xbf16>
    %c176 = arith.constant 176 : index
    %c0_9 = arith.constant 0 : index
    %19 = vector.load %arg2[%c176, %c0_9] : memref<320x128xbf16, #tpu.memory_space<vmem>>, vector<128x128xbf16>
    %c304 = arith.constant 304 : index
    %c0_10 = arith.constant 0 : index
    %20 = vector.load %arg2[%c304, %c0_10] : memref<320x128xbf16, #tpu.memory_space<vmem>>, vector<1x128xbf16>
    %cst_11 = arith.constant dense<0.000000e+00> : vector<8x128xf32>
    %21 = tpu.matmul %18, %19, %cst_11 {dimension_numbers = #tpu.dot_dimension_numbers<[1], [0], [0], [1], [0, 0, 1, 1], [], []>} : vector<8x128xbf16>, vector<128x128xbf16>, vector<8x128xf32> -> vector<8x128xf32>
    %22 = arith.extf %20 : vector<1x128xbf16> to vector<1x128xf32>
    %23 = vector.broadcast %22 : vector<1x128xf32> to vector<8x128xf32>
    %24 = arith.addf %21, %23 : vector<8x128xf32>
    %c0_12 = arith.constant 0 : index
    %c0_13 = arith.constant 0 : index
    %25 = vector.load %arg3[%c0_12, %c0_13] : memref<8x128xf32, #tpu.memory_space<vmem>>, vector<8x128xf32>
    tpu.vector_store %arg3[%c0_12, %c0_13], %24 {strides = array<i32>} : memref<8x128xf32, #tpu.memory_space<vmem>>, vector<8x128xf32>,
    return
  }
  func.func @transform_0(%arg0: i32) -> (i32, i32) {
    %c0_i32 = arith.constant 0 : i32
    %c0_i32_0 = arith.constant 0 : i32
    return %arg0, %c0_i32 : i32, i32
  }
  func.func @transform_1(%arg0: i32) -> (i32, i32) {
    %c0_i32 = arith.constant 0 : i32
    %c0_i32_0 = arith.constant 0 : i32
    %c0_i32_1 = arith.constant 0 : i32
    return %c0_i32, %c0_i32_0 : i32, i32
  }
  func.func @transform_2(%arg0: i32) -> (i32, i32) {
    %c0_i32 = arith.constant 0 : i32
    %c0_i32_0 = arith.constant 0 : i32
    return %arg0, %c0_i32 : i32, i32
  }
}

</mosaic_0001>

<llo_original>
// kernel: forward.1
$region0: #{forward.1}
  #allocation0 [shape = 'u32[]', space=smem, size = 0x4, offset = 0x4, fixed_abs, tag = 'smem constant byte address 0x4 - core index']
  #allocation1 [shape = 'u32[72,128]{1,0:T(1,128)}', space=vmem, size = 0x9000, scoped, tag = 'internal scratch']
  %s0 = inlined_call_operand.vmem [shape: bf16[8,16], index: 0, kind: input, shape index: {}]
  %s1 = inlined_call_operand.hbm [shape: bf16[320,128], index: 1, kind: input, shape index: {}]
  %s2 = inlined_call_operand.vmem [shape: f32[8,128], index: 2, kind: output, shape index: {}]
  %s3 = sld [smem:[#allocation0]]
  $region22: #{forward.1} parent=0
    _
  %s5 = ssub.s32 1, %s3
  %s6 = scalar_select 0, %s5, %s3
  $region1: #{forward.1} parent=0
    #allocation2 [shape = 'u8[81920]{0}', space=vmem, size = 0x14000, scoped, tag = 'input window, operand 1, single buffered']
    #allocation3 [shape = 's32[1]{0}', space=sflag, size = 0x4, scoped, tag = 'scoped memory for forward.1']
    %7 = vsyncpa [#allocation3], 0
    // Predicated region
    $region2: #{forward.1} parent=1 // pred_check
      _
    $region3: #{forward.1} parent=1 // pred_check_branch
      %9 = sbr.rel (0) target = $region5
    $region4: #{forward.1} parent=1 // pred_region
      _
    $region5: #{forward.1} parent=1 // pred_fallthru
      _
    // Predicated region
    $region6: #{forward.1} parent=1 // pred_check
      _
    $region7: #{forward.1} parent=1 // pred_check_branch
      %11 = sbr.rel (0) target = $region9
    $region8: #{forward.1} parent=1 // pred_region
      %13 = vsyncadd [#allocation3], 0
      %s14 = sshll.u32 %s1, 4
      %s15 = int_to_ptr.hbm [resolvable:$true] %s14
      %s16 = sshll.u32 [#allocation2], 4
      %s17 = int_to_ptr.vmem [resolvable:$true] %s16
      %22 = dma.hbm_to_vmem [thread:$0]  %s15, 2560, %s17, [#allocation3], 64, 64, 4
    $region9: #{forward.1} parent=1 // pred_fallthru
      _
    // Predicated region
    $region10: #{forward.1} parent=1 // pred_check
      _
    $region11: #{forward.1} parent=1 // pred_check_branch
      %24 = sbr.rel (0) target = $region13
    $region12: #{forward.1} parent=1 // pred_region
      %26 = dma.done [#allocation3], 2560
    $region13: #{forward.1} parent=1 // pred_fallthru
      _
    %v28 = vld [vmem:[%s0] sm:$0xf]
    %v29 = vld [vmem:[#allocation2] sm:$0xf]
    %v30 = vld [vmem:[#allocation2 + $0x4] sm:$0xf]
    %v31 = vld [vmem:[#allocation2 + $0x8] sm:$0x1]
    %v32 = vunpack.c.l.bf16 %v31
    %v33 = vperm.slane %v32, 0
    %v36 = vunpack.c.l.b16 %v29
    %v37 = vunpack.c.l.b16 %v30
    %v38 = vpack.c.b16 %v37, %v36
    %vm40 = vcmask 130048
    %v42 = vsel %vm40, %v28, 0
    %44 = vmatpush.bf16.msra.mxu0 0
    %45 = vmatpush.bf16.msra.mxu0 0
    %46 = vmatpush.bf16.msra.mxu0 0
    %47 = vmatpush.bf16.msra.mxu0 0
    %48 = vmatpush.bf16.msra.mxu0 0
    %49 = vmatpush.bf16.msra.mxu0 0
    %50 = vmatpush.bf16.msra.mxu0 0
    %51 = vmatpush.bf16.msra.mxu0 %v38
    %52 = vmatmul.bf16.gmra.mxu0 %v42
    %v53 = vpop.f32.mrf.mxu0
    %v54 = vadd.f32 %v33, %v53
    %v55 = vpop.f32.mrf.mxu0
    %56 = vdwg.mxu0
    %v57 = vmax.f32 %v54, 0.0
    %v58 = vpack.c.bf16 %v57, %v57
    %v59 = vld [vmem:[#allocation2 + $0x10] sm:$0xf]
    %v60 = vld [vmem:[#allocation2 + $0x14] sm:$0xf]
    %v61 = vld [vmem:[#allocation2 + $0x18] sm:$0xf]
    %v62 = vld [vmem:[#allocation2 + $0x1c] sm:$0xf]
    %v63 = vld [vmem:[#allocation2 + $0x20] sm:$0xf]
    %v64 = vld [vmem:[#allocation2 + $0x24] sm:$0xf]
    %v65 = vld [vmem:[#allocation2 + $0x28] sm:$0xf]
    %v66 = vld [vmem:[#allocation2 + $0x2c] sm:$0xf]
    %v67 = vld [vmem:[#allocation2 + $0x30] sm:$0xf]
    %v68 = vld [vmem:[#allocation2 + $0x34] sm:$0xf]
    %v69 = vld [vmem:[#allocation2 + $0x38] sm:$0xf]
    %v70 = vld [vmem:[#allocation2 + $0x3c] sm:$0xf]
    %v71 = vld [vmem:[#allocation2 + $0x40] sm:$0xf]
    %v72 = vld [vmem:[#allocation2 + $0x44] sm:$0xf]
    %v73 = vld [vmem:[#allocation2 + $0x48] sm:$0xf]
    %v74 = vld [vmem:[#allocation2 + $0x4c] sm:$0xf]
    %v75 = vld [vmem:[#allocation2 + $0x50] sm:$0x1]
    %v76 = vunpack.c.l.bf16 %v75
    %v77 = vperm.slane %v76, 0
    %v94 = vunpack.c.l.b16 %v59
    %v95 = vunpack.c.l.b16 %v60
    %v96 = vunpack.c.l.b16 %v61
    %v97 = vunpack.c.l.b16 %v62
    %v98 = vunpack.c.l.b16 %v63
    %v99 = vunpack.c.l.b16 %v64
    %v100 = vunpack.c.l.b16 %v65
    %v101 = vunpack.c.l.b16 %v66
    %v102 = vunpack.c.l.b16 %v67
    %v103 = vunpack.c.l.b16 %v68
    %v104 = vunpack.c.l.b16 %v69
    %v105 = vunpack.c.l.b16 %v70
    %v106 = vunpack.c.l.b16 %v71
    %v107 = vunpack.c.l.b16 %v72
    %v108 = vunpack.c.l.b16 %v73
    %v109 = vunpack.c.l.b16 %v74
    %v110 = vpack.c.b16 %v95, %v94
    %v111 = vpack.c.b16 %v97, %v96
    %v112 = vpack.c.b16 %v99, %v98
    %v113 = vpack.c.b16 %v101, %v100
    %v114 = vpack.c.b16 %v103, %v102
    %v115 = vpack.c.b16 %v105, %v104
    %v116 = vpack.c.b16 %v107, %v106
    %v117 = vpack.c.b16 %v109, %v108
    %126 = vmatpush.bf16.msra.mxu0 %v117
    %127 = vmatpush.bf16.msra.mxu0 %v116
    %128 = vmatpush.bf16.msra.mxu0 %v115
    %129 = vmatpush.bf16.msra.mxu0 %v114
    %130 = vmatpush.bf16.msra.mxu0 %v113
    %131 = vmatpush.bf16.msra.mxu0 %v112
    %132 = vmatpush.bf16.msra.mxu0 %v111
    %133 = vmatpush.bf16.msra.mxu0 %v110
    %134 = vmatmul.bf16.gmra.mxu0 %v58
    %v135 = vpop.f32.mrf.mxu0
    %v136 = vadd.f32 %v77, %v135
    %v137 = vpop.f32.mrf.mxu0
    %138 = vdwg.mxu0
    %v139 = vmax.f32 %v136, 0.0
    %v140 = vpack.c.bf16 %v139, %v139
    %v141 = vld [vmem:[#allocation2 + $0x58] sm:$0xf]
    %v142 = vld [vmem:[#allocation2 + $0x5c] sm:$0xf]
    %v143 = vld [vmem:[#allocation2 + $0x60] sm:$0xf]
    %v144 = vld [vmem:[#allocation2 + $0x64] sm:$0xf]
    %v145 = vld [vmem:[#allocation2 + $0x68] sm:$0xf]
    %v146 = vld [vmem:[#allocation2 + $0x6c] sm:$0xf]
    %v147 = vld [vmem:[#allocation2 + $0x70] sm:$0xf]
    %v148 = vld [vmem:[#allocation2 + $0x74] sm:$0xf]
    %v149 = vld [vmem:[#allocation2 + $0x78] sm:$0xf]
    %v150 = vld [vmem:[#allocation2 + $0x7c] sm:$0xf]
    %v151 = vld [vmem:[#allocation2 + $0x80] sm:$0xf]
    %v152 = vld [vmem:[#allocation2 + $0x84] sm:$0xf]
    %v153 = vld [vmem:[#allocation2 + $0x88] sm:$0xf]
    %v154 = vld [vmem:[#allocation2 + $0x8c] sm:$0xf]
    %v155 = vld [vmem:[#allocation2 + $0x90] sm:$0xf]
    %v156 = vld [vmem:[#allocation2 + $0x94] sm:$0xf]
    %v157 = vld [vmem:[#allocation2 + $0x98] sm:$0x1]
    %v158 = vunpack.c.l.bf16 %v157
    %v159 = vperm.slane %v158, 0
    %v176 = vunpack.c.l.b16 %v141
    %v177 = vunpack.c.l.b16 %v142
    %v178 = vunpack.c.l.b16 %v143
    %v179 = vunpack.c.l.b16 %v144
    %v180 = vunpack.c.l.b16 %v145
    %v181 = vunpack.c.l.b16 %v146
    %v182 = vunpack.c.l.b16 %v147
    %v183 = vunpack.c.l.b16 %v148
    %v184 = vunpack.c.l.b16 %v149
    %v185 = vunpack.c.l.b16 %v150
    %v186 = vunpack.c.l.b16 %v151
    %v187 = vunpack.c.l.b16 %v152
    %v188 = vunpack.c.l.b16 %v153
    %v189 = vunpack.c.l.b16 %v154
    %v190 = vunpack.c.l.b16 %v155
    %v191 = vunpack.c.l.b16 %v156
    %v192 = vpack.c.b16 %v177, %v176
    %v193 = vpack.c.b16 %v179, %v178
    %v194 = vpack.c.b16 %v181, %v180
    %v195 = vpack.c.b16 %v183, %v182
    %v196 = vpack.c.b16 %v185, %v184
    %v197 = vpack.c.b16 %v187, %v186
    %v198 = vpack.c.b16 %v189, %v188
    %v199 = vpack.c.b16 %v191, %v190
    %208 = vmatpush.bf16.msra.mxu0 %v199
    %209 = vmatpush.bf16.msra.mxu0 %v198
    %210 = vmatpush.bf16.msra.mxu0 %v197
    %211 = vmatpush.bf16.msra.mxu0 %v196
    %212 = vmatpush.bf16.msra.mxu0 %v195
    %213 = vmatpush.bf16.msra.mxu0 %v194
    %214 = vmatpush.bf16.msra.mxu0 %v193
    %215 = vmatpush.bf16.msra.mxu0 %v192
    %216 = vmatmul.bf16.gmra.mxu0 %v140
    %v217 = vpop.f32.mrf.mxu0
    %v218 = vadd.f32 %v159, %v217
    %v219 = vpop.f32.mrf.mxu0
    %220 = vdwg.mxu0
    %221 = vst [vmem:[%s2] sm:$0xff] %v218
    // Predicated region
    $region14: #{forward.1} parent=1 // pred_check
      _
    $region15: #{forward.1} parent=1 // pred_check_branch
      %223 = sbr.rel (0) target = $region17
    $region16: #{forward.1} parent=1 // pred_region
      _
    $region17: #{forward.1} parent=1 // pred_fallthru
      _
    // Predicated region
    $region18: #{forward.1} parent=1 // pred_check
      _
    $region19: #{forward.1} parent=1 // pred_check_branch
      %225 = sbr.rel (0) target = $region21
    $region20: #{forward.1} parent=1 // pred_region
      _
    $region21: #{forward.1} parent=1 // pred_fallthru
      _
    %226 = vsyncpa [#allocation3], 1

</llo_original>
